<compile_context>
chip_gen: v5e
topology: v5e:2x2
jax: 0.10.0
libtpu: 0.0.40
codegen_flags: <defaults>
</compile_context>

<pallas_src>
import jax
import jax.numpy as jnp
from jax.experimental import pallas as pl
from jax.experimental.pallas import tpu as pltpu


def transition_kernel(x_ref, p_ref, w_ref, b_ref, o_ref):
    """Fused BN(folded) + 1x1 conv + 2x2 avgpool for one batch element (NCHW).

    x_ref : (Cin, H*W)     f32  input activations, flat spatial on lanes
    p_ref : (H*W, Hp*Wp)   bf16 constant 0/1 pooling matrix (2x2/s2 window sum)
    w_ref : (Cout, Cin)    bf16 conv weight with BN scale and 0.25 folded in
    b_ref : (Cout, 1)      f32  BN-folded bias (broadcast over spatial lanes)
    o_ref : (Cout, Hp*Wp)  f32  output
    """
    x = x_ref[...].astype(jnp.bfloat16)                       # (Cin, HW)

    # 2x2/stride-2 window *sum* via MXU (0.25 scale lives in w_ref).
    pooled = jnp.dot(x, p_ref[...],
                     preferred_element_type=jnp.float32)      # (Cin, HpWp)

    # Folded BN + 1x1 conv as one MXU matmul (bf16 in, f32 acc).
    z = jnp.dot(w_ref[...], pooled.astype(jnp.bfloat16),
                preferred_element_type=jnp.float32)           # (Cout, HpWp)

    o_ref[...] = z + b_ref[...]


@jax.jit
def transition_layer_pallas(x_nchw, bn_scale, bn_bias, conv_w):
    """x_nchw: (N, Cin, H, W); bn_scale/bn_bias: (Cin,); conv_w: (Cout, Cin)."""
    N, Cin, H, W = x_nchw.shape
    Cout = conv_w.shape[0]
    Hp, Wp = H // 2, W // 2
    HW, HpWp = H * W, Hp * Wp

    # Fold eval-mode BN affine + the 1/4 pool normalization into the conv
    # weight (exact: BN-affine and the 1x1 conv commute with the spatial
    # average; the bias term passes through the average unchanged).
    wf = conv_w.astype(jnp.float32)                               # (Cout, Cin)
    w_fold = (0.25 * bn_scale[None, :] * wf).astype(jnp.bfloat16)  # (Cout, Cin)
    b_fold = (wf @ bn_bias.astype(jnp.float32)).reshape(Cout, 1)   # (Cout, 1)
    b_fold = b_fold.astype(jnp.float32)

    # Constant 0/1 pooling matrix: flat spatial index q = h*W + w maps to
    # pool cell p = (h//2)*Wp + (w//2).  Exactly representable in bf16.
    h_idx = jnp.arange(H)[:, None]
    w_idx = jnp.arange(W)[None, :]
    cell = ((h_idx // 2) * Wp + (w_idx // 2)).reshape(HW)          # (HW,)
    pool_mat = (cell[:, None] == jnp.arange(HpWp)[None, :]).astype(jnp.bfloat16)

    # Zero-copy reshapes: only contiguous minor dims are merged/split.
    x_flat = x_nchw.reshape(N, Cin, HW)

    out_flat = pl.pallas_call(
        transition_kernel,
        out_shape=jax.ShapeDtypeStruct((N, Cout, HpWp), jnp.float32),
        grid_spec=pltpu.PrefetchScalarGridSpec(
            num_scalar_prefetch=0,
            grid=(N,),
            in_specs=[
                pl.BlockSpec((None, Cin, HW), lambda n: (n, 0, 0)),
                pl.BlockSpec((HW, HpWp), lambda n: (0, 0)),
                pl.BlockSpec((Cout, Cin), lambda n: (0, 0)),
                pl.BlockSpec((Cout, 1), lambda n: (0, 0)),
            ],
            out_specs=pl.BlockSpec((None, Cout, HpWp), lambda n: (n, 0, 0)),
        ),
        compiler_params=pltpu.CompilerParams(
            dimension_semantics=("parallel",)),
    )(x_flat, pool_mat, w_fold, b_fold)

    return out_flat.reshape(N, Cout, Hp, Wp)


def transition_layer_ref(x_nchw, bn_scale, bn_bias, conv_w):
    """Pure-JAX reference (eval-mode BN -> 1x1 conv -> 2x2 avgpool), f32."""
    y = x_nchw * bn_scale[None, :, None, None] + bn_bias[None, :, None, None]
    z = jnp.einsum("nchw,oc->nohw", y, conv_w)
    N, Co, H, W = z.shape
    return z.reshape(N, Co, H // 2, 2, W // 2, 2).mean(axis=(3, 5))


if __name__ == "__main__":
    compression_factor = 0.5
    N, C, H, W = 2, 256, 16, 16
    Cout = int(C * compression_factor)

    key = jax.random.PRNGKey(0)
    kx, kg, kb, km, kv, kw = jax.random.split(key, 6)

    x = jax.random.normal(kx, (N, C, H, W), dtype=jnp.float32)

    # Synthetic BatchNorm2d (eval-mode) parameters, folded to scale/bias.
    gamma = jax.random.uniform(kg, (C,), minval=0.5, maxval=1.5)
    beta = 0.1 * jax.random.normal(kb, (C,))
    mean = 0.1 * jax.random.normal(km, (C,))
    var = jax.random.uniform(kv, (C,), minval=0.5, maxval=1.5)
    eps = 1e-5
    bn_scale = (gamma / jnp.sqrt(var + eps)).astype(jnp.float32)
    bn_bias = (beta - mean * bn_scale).astype(jnp.float32)

    # 1x1 conv weight (PyTorch OIHW (Cout, Cin, 1, 1) squeezed to (Cout, Cin)).
    conv_w = (0.05 * jax.random.normal(kw, (Cout, C))).astype(jnp.float32)

    out = transition_layer_pallas(x, bn_scale, bn_bias, conv_w)
    out = jax.block_until_ready(out)

    expected_shape = (N, Cout, H // 2, W // 2)
    assert out.shape == expected_shape, (out.shape, expected_shape)

    ref = transition_layer_ref(x, bn_scale, bn_bias, conv_w)
    max_err = float(jnp.max(jnp.abs(out - ref)))
    assert jnp.allclose(out, ref, atol=2e-2, rtol=2e-2), max_err

    print("KERNEL_OK")
</pallas_src>

<mosaic_0001>
module attributes {stable_mosaic.version = 11 : i64} {
  func.func @transition_kernel(%arg0: i32, %arg1: memref<1x256x256xf32, #tpu.memory_space<vmem>>, %arg2: memref<256x64xbf16, #tpu.memory_space<vmem>>, %arg3: memref<128x256xbf16, #tpu.memory_space<vmem>>, %arg4: memref<128x1xf32, #tpu.memory_space<vmem>>, %arg5: memref<1x128x64xf32, #tpu.memory_space<vmem>>) attributes {dimension_semantics = [#tpu.dimension_semantics<parallel>], iteration_bounds = array<i64: 2>, scalar_prefetch = 0 : i64, scratch_operands = 0 : i64, tpu.core_type = #tpu.core_type<tc>, window_params = [{transform_indices = @transform_0, window_bounds = array<i64: 1, 256, 256>}, {pipeline_mode = #tpu.pipeline_mode<synchronous>, transform_indices = @transform_1, window_bounds = array<i64: 256, 64>}, {pipeline_mode = #tpu.pipeline_mode<synchronous>, transform_indices = @transform_2, window_bounds = array<i64: 128, 256>}, {pipeline_mode = #tpu.pipeline_mode<synchronous>, transform_indices = @transform_3, window_bounds = array<i64: 128, 1>}, {transform_indices = @transform_4, window_bounds = array<i64: 1, 128, 64>}]} {
    %c0 = arith.constant 0 : index
    %c0_0 = arith.constant 0 : index
    %c0_1 = arith.constant 0 : index
    %0 = vector.load %arg1[%c0, %c0_0, %c0_1] : memref<1x256x256xf32, #tpu.memory_space<vmem>>, vector<1x256x256xf32>
    %1 = vector.shape_cast %0 : vector<1x256x256xf32> to vector<256x256xf32>
    %2 = arith.truncf %1 : vector<256x256xf32> to vector<256x256xbf16>
    %c0_2 = arith.constant 0 : index
    %c0_3 = arith.constant 0 : index
    %3 = vector.load %arg2[%c0_2, %c0_3] : memref<256x64xbf16, #tpu.memory_space<vmem>>, vector<256x64xbf16>
    %cst = arith.constant dense<0.000000e+00> : vector<256x64xf32>
    %4 = tpu.matmul %2, %3, %cst {dimension_numbers = #tpu.dot_dimension_numbers<[1], [0], [0], [1], [0, 0, 1, 1], [], []>} : vector<256x256xbf16>, vector<256x64xbf16>, vector<256x64xf32> -> vector<256x64xf32>
    %c0_4 = arith.constant 0 : index
    %c0_5 = arith.constant 0 : index
    %5 = vector.load %arg3[%c0_4, %c0_5] : memref<128x256xbf16, #tpu.memory_space<vmem>>, vector<128x256xbf16>
    %6 = arith.truncf %4 : vector<256x64xf32> to vector<256x64xbf16>
    %cst_6 = arith.constant dense<0.000000e+00> : vector<128x64xf32>
    %7 = tpu.matmul %5, %6, %cst_6 {dimension_numbers = #tpu.dot_dimension_numbers<[1], [0], [0], [1], [0, 0, 1, 1], [], []>} : vector<128x256xbf16>, vector<256x64xbf16>, vector<128x64xf32> -> vector<128x64xf32>
    %c0_7 = arith.constant 0 : index
    %c0_8 = arith.constant 0 : index
    %8 = vector.load %arg4[%c0_7, %c0_8] : memref<128x1xf32, #tpu.memory_space<vmem>>, vector<128x1xf32>
    %9 = vector.broadcast %8 : vector<128x1xf32> to vector<128x64xf32>
    %10 = arith.addf %7, %9 : vector<128x64xf32>
    %c0_9 = arith.constant 0 : index
    %c0_10 = arith.constant 0 : index
    %c0_11 = arith.constant 0 : index
    %11 = vector.load %arg5[%c0_9, %c0_10, %c0_11] : memref<1x128x64xf32, #tpu.memory_space<vmem>>, vector<1x128x64xf32>
    %12 = vector.shape_cast %11 : vector<1x128x64xf32> to vector<128x64xf32>
    %13 = vector.shape_cast %10 : vector<128x64xf32> to vector<1x128x64xf32>
    tpu.vector_store %arg5[%c0_9, %c0_10, %c0_11], %13 {strides = array<i32>} : memref<1x128x64xf32, #tpu.memory_space<vmem>>, vector<1x128x64xf32>,
    return
  }
  func.func @transform_0(%arg0: i32) -> (i32, i32, i32) {
    %c0_i32 = arith.constant 0 : i32
    %c0_i32_0 = arith.constant 0 : i32
    %c0_i32_1 = arith.constant 0 : i32
    return %arg0, %c0_i32, %c0_i32_0 : i32, i32, i32
  }
  func.func @transform_1(%arg0: i32) -> (i32, i32) {
    %c0_i32 = arith.constant 0 : i32
    %c0_i32_0 = arith.constant 0 : i32
    %c0_i32_1 = arith.constant 0 : i32
    return %c0_i32, %c0_i32_0 : i32, i32
  }
  func.func @transform_2(%arg0: i32) -> (i32, i32) {
    %c0_i32 = arith.constant 0 : i32
    %c0_i32_0 = arith.constant 0 : i32
    %c0_i32_1 = arith.constant 0 : i32
    return %c0_i32, %c0_i32_0 : i32, i32
  }
  func.func @transform_3(%arg0: i32) -> (i32, i32) {
    %c0_i32 = arith.constant 0 : i32
    %c0_i32_0 = arith.constant 0 : i32
    %c0_i32_1 = arith.constant 0 : i32
    return %c0_i32, %c0_i32_0 : i32, i32
  }
  func.func @transform_4(%arg0: i32) -> (i32, i32, i32) {
    %c0_i32 = arith.constant 0 : i32
    %c0_i32_0 = arith.constant 0 : i32
    %c0_i32_1 = arith.constant 0 : i32
    return %arg0, %c0_i32, %c0_i32_0 : i32, i32, i32
  }
}

</mosaic_0001>

<llo_original>
// kernel: transition_layer_pallas.1
$region0: #{transition_layer_pallas.1}
  #allocation0 [shape = 'u32[]', space=smem, size = 0x4, offset = 0x4, fixed_abs, tag = 'smem constant byte address 0x4 - core index']
  #allocation1 [shape = 'u32[72,128]{1,0:T(1,128)}', space=vmem, size = 0x9000, scoped, tag = 'internal scratch']
  %s0 = inlined_call_operand.vmem [shape: f32[2,256,256], index: 0, kind: input, shape index: {}]
  %s1 = inlined_call_operand.vmem [shape: bf16[256,64], index: 1, kind: input, shape index: {}]
  %s2 = inlined_call_operand.vmem [shape: bf16[128,256], index: 2, kind: input, shape index: {}]
  %s3 = inlined_call_operand.vmem [shape: f32[128,1], index: 3, kind: input, shape index: {}]
  %s4 = inlined_call_operand.vmem [shape: f32[2,128,64], index: 4, kind: output, shape index: {}]
  %s5 = sld [smem:[#allocation0]]
  $region49: #{transition_layer_pallas.1} parent=0
    _
  %s7 = ssub.s32 1, %s5
  %s8 = scalar_select 0, %s7, %s5
  loop: start=0, step=1, limit=4
  $region2: #{transition_layer_pallas.1} parent=0 // loop_pre_header
    _
  $region3: #{transition_layer_pallas.1} parent=0 // loop_header
    %s10 = sphi 0, %s14
    %p11 = scmp.ge.s32.totalorder %s10, 4
    %s20 = sphi 0, %s22
    %s23 = sphi 0, %s20
    %s24 = sphi 0, %s23
    %s40 = sphi 0, %s24
    %s44 = sphi 0, %s44
    %s46 = sphi 0, %s44
    %s47 = sphi 0, %s46
    %s61 = sphi 0, %s47
    %s65 = sphi 0, %s65
    %s67 = sphi 0, %s65
    %s68 = sphi 0, %s67
    %s82 = sphi 0, %s68
    %s86 = sphi 0, %s86
    %s88 = sphi 0, %s86
    %s89 = sphi 0, %s88
    %s103 = sphi 0, %s89
    %s109 = sphi 0, %s111
    %s112 = sphi 0, %s109
    %s113 = sphi 0, %s112
    %s129 = sphi 0, %s113
  $region4: #{transition_layer_pallas.1} parent=0 // loop_header_branch
    %13 = sbr.rel (%p11) target = $region8
  $region5: #{transition_layer_pallas.1} parent=0 // loop_body
    %s15 = ssub.s32 %s10, 1
    %s16 = ssub.s32 %s10, 2
    %s17 = sadd.s32 %s10, 1
    %s18 = ssub.s32 %s10, %s17
    %p19 = scmp.eq.s32.totalorder %s18, 0
    %s21 = sadd.s32 %s20, 1
    %s22 = scalar_select %p19, %s20, %s21
    %p25 = pneg %p19
    %p26 = scmp.eq.s32.totalorder %s10, 1
    %p27 = por %p25, %p26
    %p28 = scmp.ne.s32.totalorder %s20, %s23
    %p29 = scmp.eq.s32.totalorder %s10, 0
    %p30 = por %p28, %p29
    %p31 = scmp.ne.s32.totalorder %s20, %s23
    %p32 = scmp.eq.s32.totalorder %s15, 1
    %p33 = por %p31, %p32
    %p34 = scmp.ne.s32.totalorder %s23, %s24
    %p35 = scmp.eq.s32.totalorder %s15, 0
    %p36 = por %p34, %p35
    %p37 = scmp.ne.s32.totalorder %s23, %s24
    %p38 = scmp.eq.s32.totalorder %s16, 1
    %p39 = por %p37, %p38
    %p41 = scmp.ne.s32.totalorder %s24, %s40
    %p42 = scmp.eq.s32.totalorder %s16, 0
    %p43 = por %p41, %p42
    %s45 = sadd.s32 %s44, 1
    %p48 = scmp.eq.s32.totalorder %s10, 1
    %p49 = scmp.ne.s32.totalorder %s44, %s46
    %p50 = scmp.eq.s32.totalorder %s10, 0
    %p51 = por %p49, %p50
    %p52 = scmp.ne.s32.totalorder %s44, %s46
    %p53 = scmp.eq.s32.totalorder %s15, 1
    %p54 = por %p52, %p53
    %p55 = scmp.ne.s32.totalorder %s46, %s47
    %p56 = scmp.eq.s32.totalorder %s15, 0
    %p57 = por %p55, %p56
    %p58 = scmp.ne.s32.totalorder %s46, %s47
    %p59 = scmp.eq.s32.totalorder %s16, 1
    %p60 = por %p58, %p59
    %p62 = scmp.ne.s32.totalorder %s47, %s61
    %p63 = scmp.eq.s32.totalorder %s16, 0
    %p64 = por %p62, %p63
    %s66 = sadd.s32 %s65, 1
    %p69 = scmp.eq.s32.totalorder %s10, 1
    %p70 = scmp.ne.s32.totalorder %s65, %s67
    %p71 = scmp.eq.s32.totalorder %s10, 0
    %p72 = por %p70, %p71
    %p73 = scmp.ne.s32.totalorder %s65, %s67
    %p74 = scmp.eq.s32.totalorder %s15, 1
    %p75 = por %p73, %p74
    %p76 = scmp.ne.s32.totalorder %s67, %s68
    %p77 = scmp.eq.s32.totalorder %s15, 0
    %p78 = por %p76, %p77
    %p79 = scmp.ne.s32.totalorder %s67, %s68
    %p80 = scmp.eq.s32.totalorder %s16, 1
    %p81 = por %p79, %p80
    %p83 = scmp.ne.s32.totalorder %s68, %s82
    %p84 = scmp.eq.s32.totalorder %s16, 0
    %p85 = por %p83, %p84
    %s87 = sadd.s32 %s86, 1
    %p90 = scmp.eq.s32.totalorder %s10, 1
    %p91 = scmp.ne.s32.totalorder %s86, %s88
    %p92 = scmp.eq.s32.totalorder %s10, 0
    %p93 = por %p91, %p92
    %p94 = scmp.ne.s32.totalorder %s86, %s88
    %p95 = scmp.eq.s32.totalorder %s15, 1
    %p96 = por %p94, %p95
    %p97 = scmp.ne.s32.totalorder %s88, %s89
    %p98 = scmp.eq.s32.totalorder %s15, 0
    %p99 = por %p97, %p98
    %p100 = scmp.ne.s32.totalorder %s88, %s89
    %p101 = scmp.eq.s32.totalorder %s16, 1
    %p102 = por %p100, %p101
    %p104 = scmp.ne.s32.totalorder %s89, %s103
    %p105 = scmp.eq.s32.totalorder %s16, 0
    %p106 = por %p104, %p105
    %s107 = ssub.s32 %s10, %s17
    %p108 = scmp.eq.s32.totalorder %s107, 0
    %s110 = sadd.s32 %s109, 1
    %s111 = scalar_select %p108, %s109, %s110
    %p114 = pneg %p108
    %p115 = scmp.eq.s32.totalorder %s10, 1
    %p116 = por %p114, %p115
    %p117 = scmp.ne.s32.totalorder %s109, %s112
    %p118 = scmp.eq.s32.totalorder %s10, 0
    %p119 = por %p117, %p118
    %p120 = scmp.ne.s32.totalorder %s109, %s112
    %p121 = scmp.eq.s32.totalorder %s15, 1
    %p122 = por %p120, %p121
    %p123 = scmp.ne.s32.totalorder %s112, %s113
    %p124 = scmp.eq.s32.totalorder %s15, 0
    %p125 = por %p123, %p124
    %p126 = scmp.ne.s32.totalorder %s112, %s113
    %p127 = scmp.eq.s32.totalorder %s16, 1
    %p128 = por %p126, %p127
    %p130 = scmp.ne.s32.totalorder %s113, %s129
    %p131 = scmp.eq.s32.totalorder %s16, 0
    %p132 = por %p130, %p131
    %p133 = scmp.le.s32.totalorder 1, %s10
    %p134 = scmp.lt.s32.totalorder %s10, 3
    %p135 = pnand %p133, %p134
    %p136 = pneg %p135
    // Predicated region
    $region9: #{transition_layer_pallas.1} parent=5 // pred_check
      _
    $region10: #{transition_layer_pallas.1} parent=5 // pred_check_branch
      %138 = sbr.rel (%p135) target = $region12
    $region11: #{transition_layer_pallas.1} parent=5 // pred_region
      %s139 = ssub.s32 %s10, 1
      // Predicated region
      $region13: #{transition_layer_pallas.1} parent=11 // pred_check
        %p140 = pneg %p57
      $region14: #{transition_layer_pallas.1} parent=11 // pred_check_branch
        %142 = sbr.rel (%p140) target = $region16
      $region15: #{transition_layer_pallas.1} parent=11 // pred_region
        _
      $region16: #{transition_layer_pallas.1} parent=11 // pred_fallthru
        _
      // Predicated region
      $region17: #{transition_layer_pallas.1} parent=11 // pred_check
        %p143 = pneg %p78
      $region18: #{transition_layer_pallas.1} parent=11 // pred_check_branch
        %145 = sbr.rel (%p143) target = $region20
      $region19: #{transition_layer_pallas.1} parent=11 // pred_region
        _
      $region20: #{transition_layer_pallas.1} parent=11 // pred_fallthru
        _
      // Predicated region
      $region21: #{transition_layer_pallas.1} parent=11 // pred_check
        %p146 = pneg %p99
      $region22: #{transition_layer_pallas.1} parent=11 // pred_check_branch
        %148 = sbr.rel (%p146) target = $region24
      $region23: #{transition_layer_pallas.1} parent=11 // pred_region
        _
      $region24: #{transition_layer_pallas.1} parent=11 // pred_fallthru
        _
    $region12: #{transition_layer_pallas.1} parent=5 // pred_fallthru
      _
    %p149 = scmp.lt.s32.totalorder %s10, 2
    // Predicated region
    $region25: #{transition_layer_pallas.1} parent=5 // pred_check
      %p150 = pneg %p149
    $region26: #{transition_layer_pallas.1} parent=5 // pred_check_branch
      %152 = sbr.rel (%p150) target = $region28
    $region27: #{transition_layer_pallas.1} parent=5 // pred_region
      // Predicated region
      $region29: #{transition_layer_pallas.1} parent=27 // pred_check
        %p153 = pneg %p30
      $region30: #{transition_layer_pallas.1} parent=27 // pred_check_branch
        %155 = sbr.rel (%p153) target = $region32
      $region31: #{transition_layer_pallas.1} parent=27 // pred_region
        %p156 = scmp.lt.s32.totalorder %s10, 1
        %s157 = scalar_select %p156, %s10, 1
        %s158 = smul.addr %s157, 64
        %s159 = smul.addr %s158, 8
        %s160 = scalar_lea.vmem %s0, %s159
      $region32: #{transition_layer_pallas.1} parent=27 // pred_fallthru
        _
    $region28: #{transition_layer_pallas.1} parent=5 // pred_fallthru
      _
    %p161 = scmp.le.s32.totalorder 1, %s10
    %p162 = scmp.lt.s32.totalorder %s10, 3
    %p163 = pnand %p161, %p162
    %p164 = pneg %p163
    // Predicated region
    $region33: #{transition_layer_pallas.1} parent=5 // pred_check
      _
    $region34: #{transition_layer_pallas.1} parent=5 // pred_check_branch
      %166 = sbr.rel (%p163) target = $region36
    $region35: #{transition_layer_pallas.1} parent=5 // pred_region
      %s167 = ssub.s32 %s10, 1
      %p168 = scmp.lt.s32.totalorder %s15, 1
      %s169 = scalar_select %p168, %s15, 1
      %s170 = smul.addr %s169, 64
      %s171 = smul.addr %s170, 8
      %s172 = scalar_lea.vmem %s0, %s171
      %p173 = pneg %p36
      %p174 = pneg %p33
      %p175 = pneg %p57
      %p176 = pneg %p54
      %p177 = pneg %p78
      %p178 = pneg %p75
      %p179 = pneg %p99
      %p180 = pneg %p96
      %p181 = pneg %p125
      %p182 = pneg %p122
      %p183 = scmp.lt.s32.totalorder %s15, 1
      %s184 = scalar_select %p183, %s15, 1
      %s185 = smul.addr %s184, 16
      %s186 = smul.addr %s185, 8
      %s187 = scalar_lea.vmem %s4, %s186
      %p188 = scmp.lt.s32.totalorder %s15, 1
      %s189 = scalar_select %p188, %s15, 1
      %s190 = smul.addr %s189, 64
      %s191 = smul.addr %s190, 8
      %s192 = scalar_lea.vmem %s0, %s191
      %p193 = scmp.lt.s32.totalorder %s15, 1
      %s194 = scalar_select %p193, %s15, 1
      %s195 = smul.addr %s194, 16
      %s196 = smul.addr %s195, 8
      %s197 = scalar_lea.vmem %s4, %s196
      %v198 = vld [vmem:[%s192] sm:$0xff]
      %v199 = vld [vmem:[%s192 + $0x8] sm:$0xff]
      %v200 = vld [vmem:[%s192 + $0x10] sm:$0xff]
      %v201 = vld [vmem:[%s192 + $0x18] sm:$0xff]
      %v202 = vld [vmem:[%s192 + $0x20] sm:$0xff]
      %v203 = vld [vmem:[%s192 + $0x28] sm:$0xff]
      %v204 = vld [vmem:[%s192 + $0x30] sm:$0xff]
      %v205 = vld [vmem:[%s192 + $0x38] sm:$0xff]
      %v206 = vld [vmem:[%s192 + $0x40] sm:$0xff]
      %v207 = vld [vmem:[%s192 + $0x48] sm:$0xff]
      %v208 = vld [vmem:[%s192 + $0x50] sm:$0xff]
      %v209 = vld [vmem:[%s192 + $0x58] sm:$0xff]
      %v210 = vld [vmem:[%s192 + $0x60] sm:$0xff]
      %v211 = vld [vmem:[%s192 + $0x68] sm:$0xff]
      %v212 = vld [vmem:[%s192 + $0x70] sm:$0xff]
      %v213 = vld [vmem:[%s192 + $0x78] sm:$0xff]
      %v214 = vld [vmem:[%s192 + $0x80] sm:$0xff]
      %v215 = vld [vmem:[%s192 + $0x88] sm:$0xff]
      %v216 = vld [vmem:[%s192 + $0x90] sm:$0xff]
      %v217 = vld [vmem:[%s192 + $0x98] sm:$0xff]
      %v218 = vld [vmem:[%s192 + $0xa0] sm:$0xff]
      %v219 = vld [vmem:[%s192 + $0xa8] sm:$0xff]
      %v220 = vld [vmem:[%s192 + $0xb0] sm:$0xff]
      %v221 = vld [vmem:[%s192 + $0xb8] sm:$0xff]
      %v222 = vld [vmem:[%s192 + $0xc0] sm:$0xff]
      %v223 = vld [vmem:[%s192 + $0xc8] sm:$0xff]
      %v224 = vld [vmem:[%s192 + $0xd0] sm:$0xff]
      %v225 = vld [vmem:[%s192 + $0xd8] sm:$0xff]
      %v226 = vld [vmem:[%s192 + $0xe0] sm:$0xff]
      %v227 = vld [vmem:[%s192 + $0xe8] sm:$0xff]
      %v228 = vld [vmem:[%s192 + $0xf0] sm:$0xff]
      %v229 = vld [vmem:[%s192 + $0xf8] sm:$0xff]
      %v230 = vld [vmem:[%s192 + $0x100] sm:$0xff]
      %v231 = vld [vmem:[%s192 + $0x108] sm:$0xff]
      %v232 = vld [vmem:[%s192 + $0x110] sm:$0xff]
      %v233 = vld [vmem:[%s192 + $0x118] sm:$0xff]
      %v234 = vld [vmem:[%s192 + $0x120] sm:$0xff]
      %v235 = vld [vmem:[%s192 + $0x128] sm:$0xff]
      %v236 = vld [vmem:[%s192 + $0x130] sm:$0xff]
      %v237 = vld [vmem:[%s192 + $0x138] sm:$0xff]
      %v238 = vld [vmem:[%s192 + $0x140] sm:$0xff]
      %v239 = vld [vmem:[%s192 + $0x148] sm:$0xff]
      %v240 = vld [vmem:[%s192 + $0x150] sm:$0xff]
      %v241 = vld [vmem:[%s192 + $0x158] sm:$0xff]
      %v242 = vld [vmem:[%s192 + $0x160] sm:$0xff]
      %v243 = vld [vmem:[%s192 + $0x168] sm:$0xff]
      %v244 = vld [vmem:[%s192 + $0x170] sm:$0xff]
      %v245 = vld [vmem:[%s192 + $0x178] sm:$0xff]
      %v246 = vld [vmem:[%s192 + $0x180] sm:$0xff]
      %v247 = vld [vmem:[%s192 + $0x188] sm:$0xff]
      %v248 = vld [vmem:[%s192 + $0x190] sm:$0xff]
      %v249 = vld [vmem:[%s192 + $0x198] sm:$0xff]
      %v250 = vld [vmem:[%s192 + $0x1a0] sm:$0xff]
      %v251 = vld [vmem:[%s192 + $0x1a8] sm:$0xff]
      %v252 = vld [vmem:[%s192 + $0x1b0] sm:$0xff]
      %v253 = vld [vmem:[%s192 + $0x1b8] sm:$0xff]
      %v254 = vld [vmem:[%s192 + $0x1c0] sm:$0xff]
      %v255 = vld [vmem:[%s192 + $0x1c8] sm:$0xff]
      %v256 = vld [vmem:[%s192 + $0x1d0] sm:$0xff]
      %v257 = vld [vmem:[%s192 + $0x1d8] sm:$0xff]
      %v258 = vld [vmem:[%s192 + $0x1e0] sm:$0xff]
      %v259 = vld [vmem:[%s192 + $0x1e8] sm:$0xff]
      %v260 = vld [vmem:[%s192 + $0x1f0] sm:$0xff]
      %v261 = vld [vmem:[%s192 + $0x1f8] sm:$0xff]
      %v262 = vpack.c.bf16 %v200, %v198
      %v263 = vpack.c.bf16 %v201, %v199
      %v264 = vpack.c.bf16 %v204, %v202
      %v265 = vpack.c.bf16 %v205, %v203
      %v266 = vpack.c.bf16 %v208, %v206
      %v267 = vpack.c.bf16 %v209, %v207
      %v268 = vpack.c.bf16 %v212, %v210
      %v269 = vpack.c.bf16 %v213, %v211
      %v270 = vpack.c.bf16 %v216, %v214
      %v271 = vpack.c.bf16 %v217, %v215
      %v272 = vpack.c.bf16 %v220, %v218
      %v273 = vpack.c.bf16 %v221, %v219
      %v274 = vpack.c.bf16 %v224, %v222
      %v275 = vpack.c.bf16 %v225, %v223
      %v276 = vpack.c.bf16 %v228, %v226
      %v277 = vpack.c.bf16 %v229, %v227
      %v278 = vpack.c.bf16 %v232, %v230
      %v279 = vpack.c.bf16 %v233, %v231
      %v280 = vpack.c.bf16 %v236, %v234
      %v281 = vpack.c.bf16 %v237, %v235
      %v282 = vpack.c.bf16 %v240, %v238
      %v283 = vpack.c.bf16 %v241, %v239
      %v284 = vpack.c.bf16 %v244, %v242
      %v285 = vpack.c.bf16 %v245, %v243
      %v286 = vpack.c.bf16 %v248, %v246
      %v287 = vpack.c.bf16 %v249, %v247
      %v288 = vpack.c.bf16 %v252, %v250
      %v289 = vpack.c.bf16 %v253, %v251
      %v290 = vpack.c.bf16 %v256, %v254
      %v291 = vpack.c.bf16 %v257, %v255
      %v292 = vpack.c.bf16 %v260, %v258
      %v293 = vpack.c.bf16 %v261, %v259
      %v294 = vld [vmem:[%s1] sm:$0xf]
      %v295 = vld [vmem:[%s1 + $0x4] sm:$0xf]
      %v296 = vld [vmem:[%s1 + $0x8] sm:$0xf]
      %v297 = vld [vmem:[%s1 + $0xc] sm:$0xf]
      %v298 = vld [vmem:[%s1 + $0x10] sm:$0xf]
      %v299 = vld [vmem:[%s1 + $0x14] sm:$0xf]
      %v300 = vld [vmem:[%s1 + $0x18] sm:$0xf]
      %v301 = vld [vmem:[%s1 + $0x1c] sm:$0xf]
      %v302 = vld [vmem:[%s1 + $0x20] sm:$0xf]
      %v303 = vld [vmem:[%s1 + $0x24] sm:$0xf]
      %v304 = vld [vmem:[%s1 + $0x28] sm:$0xf]
      %v305 = vld [vmem:[%s1 + $0x2c] sm:$0xf]
      %v306 = vld [vmem:[%s1 + $0x30] sm:$0xf]
      %v307 = vld [vmem:[%s1 + $0x34] sm:$0xf]
      %v308 = vld [vmem:[%s1 + $0x38] sm:$0xf]
      %v309 = vld [vmem:[%s1 + $0x3c] sm:$0xf]
      %v310 = vld [vmem:[%s1 + $0x40] sm:$0xf]
      %v311 = vld [vmem:[%s1 + $0x44] sm:$0xf]
      %v312 = vld [vmem:[%s1 + $0x48] sm:$0xf]
      %v313 = vld [vmem:[%s1 + $0x4c] sm:$0xf]
      %v314 = vld [vmem:[%s1 + $0x50] sm:$0xf]
      %v315 = vld [vmem:[%s1 + $0x54] sm:$0xf]
      %v316 = vld [vmem:[%s1 + $0x58] sm:$0xf]
      %v317 = vld [vmem:[%s1 + $0x5c] sm:$0xf]
      %v318 = vld [vmem:[%s1 + $0x60] sm:$0xf]
      %v319 = vld [vmem:[%s1 + $0x64] sm:$0xf]
      %v320 = vld [vmem:[%s1 + $0x68] sm:$0xf]
      %v321 = vld [vmem:[%s1 + $0x6c] sm:$0xf]
      %v322 = vld [vmem:[%s1 + $0x70] sm:$0xf]
      %v323 = vld [vmem:[%s1 + $0x74] sm:$0xf]
      %v324 = vld [vmem:[%s1 + $0x78] sm:$0xf]
      %v325 = vld [vmem:[%s1 + $0x7c] sm:$0xf]
      %v358 = vunpack.c.l.b16 %v294
      %v359 = vunpack.c.l.b16 %v295
      %v360 = vunpack.c.l.b16 %v296
      %v361 = vunpack.c.l.b16 %v297
      %v362 = vunpack.c.l.b16 %v298
      %v363 = vunpack.c.l.b16 %v299
      %v364 = vunpack.c.l.b16 %v300
      %v365 = vunpack.c.l.b16 %v301
      %v366 = vunpack.c.l.b16 %v302
      %v367 = vunpack.c.l.b16 %v303
      %v368 = vunpack.c.l.b16 %v304
      %v369 = vunpack.c.l.b16 %v305
      %v370 = vunpack.c.l.b16 %v306
      %v371 = vunpack.c.l.b16 %v307
      %v372 = vunpack.c.l.b16 %v308
      %v373 = vunpack.c.l.b16 %v309
      %v374 = vunpack.c.l.b16 %v310
      %v375 = vunpack.c.l.b16 %v311
      %v376 = vunpack.c.l.b16 %v312
      %v377 = vunpack.c.l.b16 %v313
      %v378 = vunpack.c.l.b16 %v314
      %v379 = vunpack.c.l.b16 %v315
      %v380 = vunpack.c.l.b16 %v316
      %v381 = vunpack.c.l.b16 %v317
      %v382 = vunpack.c.l.b16 %v318
      %v383 = vunpack.c.l.b16 %v319
      %v384 = vunpack.c.l.b16 %v320
      %v385 = vunpack.c.l.b16 %v321
      %v386 = vunpack.c.l.b16 %v322
      %v387 = vunpack.c.l.b16 %v323
      %v388 = vunpack.c.l.b16 %v324
      %v389 = vunpack.c.l.b16 %v325
      %v390 = vpack.c.b16 %v359, %v358
      %v391 = vpack.c.b16 %v361, %v360
      %v392 = vpack.c.b16 %v363, %v362
      %v393 = vpack.c.b16 %v365, %v364
      %v394 = vpack.c.b16 %v367, %v366
      %v395 = vpack.c.b16 %v369, %v368
      %v396 = vpack.c.b16 %v371, %v370
      %v397 = vpack.c.b16 %v373, %v372
      %v398 = vpack.c.b16 %v375, %v374
      %v399 = vpack.c.b16 %v377, %v376
      %v400 = vpack.c.b16 %v379, %v378
      %v401 = vpack.c.b16 %v381, %v380
      %v402 = vpack.c.b16 %v383, %v382
      %v403 = vpack.c.b16 %v385, %v384
      %v404 = vpack.c.b16 %v387, %v386
      %v405 = vpack.c.b16 %v389, %v388
      %422 = vmatpush.bf16.msra.mxu0 %v397
      %423 = vmatpush.bf16.msra.mxu0 %v396
      %424 = vmatpush.bf16.msra.mxu0 %v395
      %425 = vmatpush.bf16.msra.mxu0 %v394
      %426 = vmatpush.bf16.msra.mxu0 %v393
      %427 = vmatpush.bf16.msra.mxu0 %v392
      %428 = vmatpush.bf16.msra.mxu0 %v391
      %429 = vmatpush.bf16.msra.mxu0 %v390
      %430 = vmatmul.bf16.gmra.mxu0 %v262
      %v431 = vpop.f32.mrf.mxu0
      %v432 = vadd.f32 0.0, %v431
      %v433 = vpop.f32.mrf.mxu0
      %v434 = vadd.f32 0.0, %v433
      %435 = vmatmul.bf16.gmra.mxu0 %v264
      %v436 = vpop.f32.mrf.mxu0
      %v437 = vadd.f32 0.0, %v436
      %v438 = vpop.f32.mrf.mxu0
      %v439 = vadd.f32 0.0, %v438
      %440 = vmatmul.bf16.gmra.mxu0 %v266
      %v441 = vpop.f32.mrf.mxu0
      %v442 = vadd.f32 0.0, %v441
      %v443 = vpop.f32.mrf.mxu0
      %v444 = vadd.f32 0.0, %v443
      %445 = vmatmul.bf16.gmra.mxu0 %v268
      %v446 = vpop.f32.mrf.mxu0
      %v447 = vadd.f32 0.0, %v446
      %v448 = vpop.f32.mrf.mxu0
      %v449 = vadd.f32 0.0, %v448
      %450 = vmatmul.bf16.gmra.mxu0 %v270
      %v451 = vpop.f32.mrf.mxu0
      %v452 = vadd.f32 0.0, %v451
      %v453 = vpop.f32.mrf.mxu0
      %v454 = vadd.f32 0.0, %v453
      %455 = vmatmul.bf16.gmra.mxu0 %v272
      %v456 = vpop.f32.mrf.mxu0
      %v457 = vadd.f32 0.0, %v456
      %v458 = vpop.f32.mrf.mxu0
      %v459 = vadd.f32 0.0, %v458
      %460 = vmatmul.bf16.gmra.mxu0 %v274
      %v461 = vpop.f32.mrf.mxu0
      %v462 = vadd.f32 0.0, %v461
      %v463 = vpop.f32.mrf.mxu0
      %v464 = vadd.f32 0.0, %v463
      %465 = vmatmul.bf16.gmra.mxu0 %v276
      %v466 = vpop.f32.mrf.mxu0
      %v467 = vadd.f32 0.0, %v466
      %v468 = vpop.f32.mrf.mxu0
      %v469 = vadd.f32 0.0, %v468
      %470 = vmatmul.bf16.gmra.mxu0 %v278
      %v471 = vpop.f32.mrf.mxu0
      %v472 = vadd.f32 0.0, %v471
      %v473 = vpop.f32.mrf.mxu0
      %v474 = vadd.f32 0.0, %v473
      %475 = vmatmul.bf16.gmra.mxu0 %v280
      %v476 = vpop.f32.mrf.mxu0
      %v477 = vadd.f32 0.0, %v476
      %v478 = vpop.f32.mrf.mxu0
      %v479 = vadd.f32 0.0, %v478
      %480 = vmatmul.bf16.gmra.mxu0 %v282
      %v481 = vpop.f32.mrf.mxu0
      %v482 = vadd.f32 0.0, %v481
      %v483 = vpop.f32.mrf.mxu0
      %v484 = vadd.f32 0.0, %v483
      %485 = vmatmul.bf16.gmra.mxu0 %v284
      %v486 = vpop.f32.mrf.mxu0
      %v487 = vadd.f32 0.0, %v486
      %v488 = vpop.f32.mrf.mxu0
      %v489 = vadd.f32 0.0, %v488
      %490 = vmatmul.bf16.gmra.mxu0 %v286
      %v491 = vpop.f32.mrf.mxu0
      %v492 = vadd.f32 0.0, %v491
      %v493 = vpop.f32.mrf.mxu0
      %v494 = vadd.f32 0.0, %v493
      %495 = vmatmul.bf16.gmra.mxu0 %v288
      %v496 = vpop.f32.mrf.mxu0
      %v497 = vadd.f32 0.0, %v496
      %v498 = vpop.f32.mrf.mxu0
      %v499 = vadd.f32 0.0, %v498
      %500 = vmatmul.bf16.gmra.mxu0 %v290
      %v501 = vpop.f32.mrf.mxu0
      %v502 = vadd.f32 0.0, %v501
      %v503 = vpop.f32.mrf.mxu0
      %v504 = vadd.f32 0.0, %v503
      %505 = vmatmul.bf16.gmra.mxu0 %v292
      %v506 = vpop.f32.mrf.mxu0
      %v507 = vadd.f32 0.0, %v506
      %v508 = vpop.f32.mrf.mxu0
      %v509 = vadd.f32 0.0, %v508
      %510 = vdwg.mxu0
      %511 = vmatpush.bf16.msra.mxu0 %v405
      %512 = vmatpush.bf16.msra.mxu0 %v404
      %513 = vmatpush.bf16.msra.mxu0 %v403
      %514 = vmatpush.bf16.msra.mxu0 %v402
      %515 = vmatpush.bf16.msra.mxu0 %v401
      %516 = vmatpush.bf16.msra.mxu0 %v400
      %517 = vmatpush.bf16.msra.mxu0 %v399
      %518 = vmatpush.bf16.msra.mxu0 %v398
      %519 = vmatmul.bf16.gmra.mxu0 %v263
      %v520 = vpop.f32.mrf.mxu0
      %v521 = vadd.f32 %v432, %v520
      %v522 = vpop.f32.mrf.mxu0
      %v523 = vadd.f32 %v434, %v522
      %524 = vmatmul.bf16.gmra.mxu0 %v265
      %v525 = vpop.f32.mrf.mxu0
      %v526 = vadd.f32 %v437, %v525
      %v527 = vpop.f32.mrf.mxu0
      %v528 = vadd.f32 %v439, %v527
      %529 = vmatmul.bf16.gmra.mxu0 %v267
      %v530 = vpop.f32.mrf.mxu0
      %v531 = vadd.f32 %v442, %v530
      %v532 = vpop.f32.mrf.mxu0
      %v533 = vadd.f32 %v444, %v532
      %534 = vmatmul.bf16.gmra.mxu0 %v269
      %v535 = vpop.f32.mrf.mxu0
      %v536 = vadd.f32 %v447, %v535
      %v537 = vpop.f32.mrf.mxu0
      %v538 = vadd.f32 %v449, %v537
      %539 = vmatmul.bf16.gmra.mxu0 %v271
      %v540 = vpop.f32.mrf.mxu0
      %v541 = vadd.f32 %v452, %v540
      %v542 = vpop.f32.mrf.mxu0
      %v543 = vadd.f32 %v454, %v542
      %544 = vmatmul.bf16.gmra.mxu0 %v273
      %v545 = vpop.f32.mrf.mxu0
      %v546 = vadd.f32 %v457, %v545
      %v547 = vpop.f32.mrf.mxu0
      %v548 = vadd.f32 %v459, %v547
      %549 = vmatmul.bf16.gmra.mxu0 %v275
      %v550 = vpop.f32.mrf.mxu0
      %v551 = vadd.f32 %v462, %v550
      %v552 = vpop.f32.mrf.mxu0
      %v553 = vadd.f32 %v464, %v552
      %554 = vmatmul.bf16.gmra.mxu0 %v277
      %v555 = vpop.f32.mrf.mxu0
      %v556 = vadd.f32 %v467, %v555
      %v557 = vpop.f32.mrf.mxu0
      %v558 = vadd.f32 %v469, %v557
      %559 = vmatmul.bf16.gmra.mxu0 %v279
      %v560 = vpop.f32.mrf.mxu0
      %v561 = vadd.f32 %v472, %v560
      %v562 = vpop.f32.mrf.mxu0
      %v563 = vadd.f32 %v474, %v562
      %564 = vmatmul.bf16.gmra.mxu0 %v281
      %v565 = vpop.f32.mrf.mxu0
      %v566 = vadd.f32 %v477, %v565
      %v567 = vpop.f32.mrf.mxu0
      %v568 = vadd.f32 %v479, %v567
      %569 = vmatmul.bf16.gmra.mxu0 %v283
      %v570 = vpop.f32.mrf.mxu0
      %v571 = vadd.f32 %v482, %v570
      %v572 = vpop.f32.mrf.mxu0
      %v573 = vadd.f32 %v484, %v572
      %574 = vmatmul.bf16.gmra.mxu0 %v285
      %v575 = vpop.f32.mrf.mxu0
      %v576 = vadd.f32 %v487, %v575
      %v577 = vpop.f32.mrf.mxu0
      %v578 = vadd.f32 %v489, %v577
      %579 = vmatmul.bf16.gmra.mxu0 %v287
      %v580 = vpop.f32.mrf.mxu0
      %v581 = vadd.f32 %v492, %v580
      %v582 = vpop.f32.mrf.mxu0
      %v583 = vadd.f32 %v494, %v582
      %584 = vmatmul.bf16.gmra.mxu0 %v289
      %v585 = vpop.f32.mrf.mxu0
      %v586 = vadd.f32 %v497, %v585
      %v587 = vpop.f32.mrf.mxu0
      %v588 = vadd.f32 %v499, %v587
      %589 = vmatmul.bf16.gmra.mxu0 %v291
      %v590 = vpop.f32.mrf.mxu0
      %v591 = vadd.f32 %v502, %v590
      %v592 = vpop.f32.mrf.mxu0
      %v593 = vadd.f32 %v504, %v592
      %594 = vmatmul.bf16.gmra.mxu0 %v293
      %v595 = vpop.f32.mrf.mxu0
      %v596 = vadd.f32 %v507, %v595
      %v597 = vpop.f32.mrf.mxu0
      %v598 = vadd.f32 %v509, %v597
      %599 = vdwg.mxu0
      %v600 = vld [vmem:[%s2] sm:$0xff]
      %v601 = vld [vmem:[%s2 + $0x8] sm:$0xff]
      %v602 = vld [vmem:[%s2 + $0x10] sm:$0xff]
      %v603 = vld [vmem:[%s2 + $0x18] sm:$0xff]
      %v604 = vld [vmem:[%s2 + $0x20] sm:$0xff]
      %v605 = vld [vmem:[%s2 + $0x28] sm:$0xff]
      %v606 = vld [vmem:[%s2 + $0x30] sm:$0xff]
      %v607 = vld [vmem:[%s2 + $0x38] sm:$0xff]
      %v608 = vld [vmem:[%s2 + $0x40] sm:$0xff]
      %v609 = vld [vmem:[%s2 + $0x48] sm:$0xff]
      %v610 = vld [vmem:[%s2 + $0x50] sm:$0xff]
      %v611 = vld [vmem:[%s2 + $0x58] sm:$0xff]
      %v612 = vld [vmem:[%s2 + $0x60] sm:$0xff]
      %v613 = vld [vmem:[%s2 + $0x68] sm:$0xff]
      %v614 = vld [vmem:[%s2 + $0x70] sm:$0xff]
      %v615 = vld [vmem:[%s2 + $0x78] sm:$0xff]
      %v616 = vpack.c.bf16 %v523, %v521
      %v617 = vpack.c.bf16 %v528, %v526
      %v618 = vpack.c.bf16 %v533, %v531
      %v619 = vpack.c.bf16 %v538, %v536
      %v620 = vpack.c.bf16 %v543, %v541
      %v621 = vpack.c.bf16 %v548, %v546
      %v622 = vpack.c.bf16 %v553, %v551
      %v623 = vpack.c.bf16 %v558, %v556
      %v624 = vpack.c.bf16 %v563, %v561
      %v625 = vpack.c.bf16 %v568, %v566
      %v626 = vpack.c.bf16 %v573, %v571
      %v627 = vpack.c.bf16 %v578, %v576
      %v628 = vpack.c.bf16 %v583, %v581
      %v629 = vpack.c.bf16 %v588, %v586
      %v630 = vpack.c.bf16 %v593, %v591
      %v631 = vpack.c.bf16 %v598, %v596
      %v632 = vld [vmem:[%s3] sm:$0xff]
      %v633 = vld [vmem:[%s3 + $0x8] sm:$0xff]
      %v634 = vld [vmem:[%s3 + $0x10] sm:$0xff]
      %v635 = vld [vmem:[%s3 + $0x18] sm:$0xff]
      %v636 = vld [vmem:[%s3 + $0x20] sm:$0xff]
      %v637 = vld [vmem:[%s3 + $0x28] sm:$0xff]
      %v638 = vld [vmem:[%s3 + $0x30] sm:$0xff]
      %v639 = vld [vmem:[%s3 + $0x38] sm:$0xff]
      %v640 = vld [vmem:[%s3 + $0x40] sm:$0xff]
      %v641 = vld [vmem:[%s3 + $0x48] sm:$0xff]
      %v642 = vld [vmem:[%s3 + $0x50] sm:$0xff]
      %v643 = vld [vmem:[%s3 + $0x58] sm:$0xff]
      %v644 = vld [vmem:[%s3 + $0x60] sm:$0xff]
      %v645 = vld [vmem:[%s3 + $0x68] sm:$0xff]
      %v646 = vld [vmem:[%s3 + $0x70] sm:$0xff]
      %v647 = vld [vmem:[%s3 + $0x78] sm:$0xff]
      %649 = vset.pattern.permute.xlu0 0
      %650 = vperm.xlu0 %649, %v632
      %v651 = vpop.permute.xlu0 %650
      %654 = vset.pattern.permute.xlu0 0
      %655 = vperm.xlu0 %654, %v633
      %v656 = vpop.permute.xlu0 %655
      %659 = vset.pattern.permute.xlu0 0
      %660 = vperm.xlu0 %659, %v634
      %v661 = vpop.permute.xlu0 %660
      %664 = vset.pattern.permute.xlu0 0
      %665 = vperm.xlu0 %664, %v635
      %v666 = vpop.permute.xlu0 %665
      %669 = vset.pattern.permute.xlu0 0
      %670 = vperm.xlu0 %669, %v636
      %v671 = vpop.permute.xlu0 %670
      %674 = vset.pattern.permute.xlu0 0
      %675 = vperm.xlu0 %674, %v637
      %v676 = vpop.permute.xlu0 %675
      %679 = vset.pattern.permute.xlu0 0
      %680 = vperm.xlu0 %679, %v638
      %v681 = vpop.permute.xlu0 %680
      %684 = vset.pattern.permute.xlu0 0
      %685 = vperm.xlu0 %684, %v639
      %v686 = vpop.permute.xlu0 %685
      %689 = vset.pattern.permute.xlu0 0
      %690 = vperm.xlu0 %689, %v640
      %v691 = vpop.permute.xlu0 %690
      %694 = vset.pattern.permute.xlu0 0
      %695 = vperm.xlu0 %694, %v641
      %v696 = vpop.permute.xlu0 %695
      %699 = vset.pattern.permute.xlu0 0
      %700 = vperm.xlu0 %699, %v642
      %v701 = vpop.permute.xlu0 %700
      %704 = vset.pattern.permute.xlu0 0
      %705 = vperm.xlu0 %704, %v643
      %v706 = vpop.permute.xlu0 %705
      %709 = vset.pattern.permute.xlu0 0
      %710 = vperm.xlu0 %709, %v644
      %v711 = vpop.permute.xlu0 %710
      %714 = vset.pattern.permute.xlu0 0
      %715 = vperm.xlu0 %714, %v645
      %v716 = vpop.permute.xlu0 %715
      %719 = vset.pattern.permute.xlu0 0
      %720 = vperm.xlu0 %719, %v646
      %v721 = vpop.permute.xlu0 %720
      %724 = vset.pattern.permute.xlu0 0
      %725 = vperm.xlu0 %724, %v647
      %v726 = vpop.permute.xlu0 %725
      %v744 = vunpack.c.l.b16 %v600
      %v745 = vunpack.c.h.b16 %v600
      %v746 = vunpack.c.l.b16 %v601
      %v747 = vunpack.c.h.b16 %v601
      %v748 = vunpack.c.l.b16 %v602
      %v749 = vunpack.c.h.b16 %v602
      %v750 = vunpack.c.l.b16 %v603
      %v751 = vunpack.c.h.b16 %v603
      %v752 = vunpack.c.l.b16 %v604
      %v753 = vunpack.c.h.b16 %v604
      %v754 = vunpack.c.l.b16 %v605
      %v755 = vunpack.c.h.b16 %v605
      %v756 = vunpack.c.l.b16 %v606
      %v757 = vunpack.c.h.b16 %v606
      %v758 = vunpack.c.l.b16 %v607
      %v759 = vunpack.c.h.b16 %v607
      %v760 = vunpack.c.l.b16 %v608
      %v761 = vunpack.c.h.b16 %v608
      %v762 = vunpack.c.l.b16 %v609
      %v763 = vunpack.c.h.b16 %v609
      %v764 = vunpack.c.l.b16 %v610
      %v765 = vunpack.c.h.b16 %v610
      %v766 = vunpack.c.l.b16 %v611
      %v767 = vunpack.c.h.b16 %v611
      %v768 = vunpack.c.l.b16 %v612
      %v769 = vunpack.c.h.b16 %v612
      %v770 = vunpack.c.l.b16 %v613
      %v771 = vunpack.c.h.b16 %v613
      %v772 = vunpack.c.l.b16 %v614
      %v773 = vunpack.c.h.b16 %v614
      %v774 = vunpack.c.l.b16 %v615
      %v775 = vunpack.c.h.b16 %v615
      %v776 = vpack.c.b16 %v746, %v744
      %v777 = vpack.c.b16 %v747, %v745
      %v778 = vpack.c.b16 %v750, %v748
      %v779 = vpack.c.b16 %v751, %v749
      %v780 = vpack.c.b16 %v754, %v752
      %v781 = vpack.c.b16 %v755, %v753
      %v782 = vpack.c.b16 %v758, %v756
      %v783 = vpack.c.b16 %v759, %v757
      %v784 = vpack.c.b16 %v762, %v760
      %v785 = vpack.c.b16 %v763, %v761
      %v786 = vpack.c.b16 %v766, %v764
      %v787 = vpack.c.b16 %v767, %v765
      %v788 = vpack.c.b16 %v770, %v768
      %v789 = vpack.c.b16 %v771, %v769
      %v790 = vpack.c.b16 %v774, %v772
      %v791 = vpack.c.b16 %v775, %v773
      %808 = vmatpush.bf16.msra.mxu0 %v623
      %809 = vmatpush.bf16.msra.mxu0 %v622
      %810 = vmatpush.bf16.msra.mxu0 %v621
      %811 = vmatpush.bf16.msra.mxu0 %v620
      %812 = vmatpush.bf16.msra.mxu0 %v619
      %813 = vmatpush.bf16.msra.mxu0 %v618
      %814 = vmatpush.bf16.msra.mxu0 %v617
      %815 = vmatpush.bf16.msra.mxu0 %v616
      %816 = vmatmul.bf16.gmra.mxu0 %v776
      %v817 = vpop.f32.mrf.mxu0
      %v818 = vadd.f32 %v651, %v817
      %v819 = vpop.f32.mrf.mxu0
      %v820 = vadd.f32 %v656, %v819
      %821 = vmatmul.bf16.gmra.mxu0 %v778
      %v822 = vpop.f32.mrf.mxu0
      %v823 = vadd.f32 %v661, %v822
      %v824 = vpop.f32.mrf.mxu0
      %v825 = vadd.f32 %v666, %v824
      %826 = vmatmul.bf16.gmra.mxu0 %v780
      %v827 = vpop.f32.mrf.mxu0
      %v828 = vadd.f32 %v671, %v827
      %v829 = vpop.f32.mrf.mxu0
      %v830 = vadd.f32 %v676, %v829
      %831 = vmatmul.bf16.gmra.mxu0 %v782
      %v832 = vpop.f32.mrf.mxu0
      %v833 = vadd.f32 %v681, %v832
      %v834 = vpop.f32.mrf.mxu0
      %v835 = vadd.f32 %v686, %v834
      %836 = vmatmul.bf16.gmra.mxu0 %v784
      %v837 = vpop.f32.mrf.mxu0
      %v838 = vadd.f32 %v691, %v837
      %v839 = vpop.f32.mrf.mxu0
      %v840 = vadd.f32 %v696, %v839
      %841 = vmatmul.bf16.gmra.mxu0 %v786
      %v842 = vpop.f32.mrf.mxu0
      %v843 = vadd.f32 %v701, %v842
      %v844 = vpop.f32.mrf.mxu0
      %v845 = vadd.f32 %v706, %v844
      %846 = vmatmul.bf16.gmra.mxu0 %v788
      %v847 = vpop.f32.mrf.mxu0
      %v848 = vadd.f32 %v711, %v847
      %v849 = vpop.f32.mrf.mxu0
      %v850 = vadd.f32 %v716, %v849
      %851 = vmatmul.bf16.gmra.mxu0 %v790
      %v852 = vpop.f32.mrf.mxu0
      %v853 = vadd.f32 %v721, %v852
      %v854 = vpop.f32.mrf.mxu0
      %v855 = vadd.f32 %v726, %v854
      %856 = vdwg.mxu0
      %857 = vmatpush.bf16.msra.mxu0 %v631
      %858 = vmatpush.bf16.msra.mxu0 %v630
      %859 = vmatpush.bf16.msra.mxu0 %v629
      %860 = vmatpush.bf16.msra.mxu0 %v628
      %861 = vmatpush.bf16.msra.mxu0 %v627
      %862 = vmatpush.bf16.msra.mxu0 %v626
      %863 = vmatpush.bf16.msra.mxu0 %v625
      %864 = vmatpush.bf16.msra.mxu0 %v624
      %865 = vmatmul.bf16.gmra.mxu0 %v777
      %v866 = vpop.f32.mrf.mxu0
      %v867 = vadd.f32 %v818, %v866
      %v868 = vpop.f32.mrf.mxu0
      %v869 = vadd.f32 %v820, %v868
      %870 = vmatmul.bf16.gmra.mxu0 %v779
      %v871 = vpop.f32.mrf.mxu0
      %v872 = vadd.f32 %v823, %v871
      %v873 = vpop.f32.mrf.mxu0
      %v874 = vadd.f32 %v825, %v873
      %875 = vmatmul.bf16.gmra.mxu0 %v781
      %v876 = vpop.f32.mrf.mxu0
      %v877 = vadd.f32 %v828, %v876
      %v878 = vpop.f32.mrf.mxu0
      %v879 = vadd.f32 %v830, %v878
      %880 = vmatmul.bf16.gmra.mxu0 %v783
      %v881 = vpop.f32.mrf.mxu0
      %v882 = vadd.f32 %v833, %v881
      %v883 = vpop.f32.mrf.mxu0
      %v884 = vadd.f32 %v835, %v883
      %885 = vmatmul.bf16.gmra.mxu0 %v785
      %v886 = vpop.f32.mrf.mxu0
      %v887 = vadd.f32 %v838, %v886
      %v888 = vpop.f32.mrf.mxu0
      %v889 = vadd.f32 %v840, %v888
      %890 = vmatmul.bf16.gmra.mxu0 %v787
      %v891 = vpop.f32.mrf.mxu0
      %v892 = vadd.f32 %v843, %v891
      %v893 = vpop.f32.mrf.mxu0
      %v894 = vadd.f32 %v845, %v893
      %895 = vmatmul.bf16.gmra.mxu0 %v789
      %v896 = vpop.f32.mrf.mxu0
      %v897 = vadd.f32 %v848, %v896
      %v898 = vpop.f32.mrf.mxu0
      %v899 = vadd.f32 %v850, %v898
      %900 = vmatmul.bf16.gmra.mxu0 %v791
      %v901 = vpop.f32.mrf.mxu0
      %v902 = vadd.f32 %v853, %v901
      %v903 = vpop.f32.mrf.mxu0
      %v904 = vadd.f32 %v855, %v903
      %905 = vdwg.mxu0
      %vm906 = vcmask 523264
      %907 = vst.msk [vmem:[%s197] sm:$0xff] %vm906, %v867
      %908 = vst.msk [vmem:[%s197 + $0x8] sm:$0xff] %vm906, %v869
      %909 = vst.msk [vmem:[%s197 + $0x10] sm:$0xff] %vm906, %v872
      %910 = vst.msk [vmem:[%s197 + $0x18] sm:$0xff] %vm906, %v874
      %911 = vst.msk [vmem:[%s197 + $0x20] sm:$0xff] %vm906, %v877
      %912 = vst.msk [vmem:[%s197 + $0x28] sm:$0xff] %vm906, %v879
      %913 = vst.msk [vmem:[%s197 + $0x30] sm:$0xff] %vm906, %v882
      %914 = vst.msk [vmem:[%s197 + $0x38] sm:$0xff] %vm906, %v884
      %915 = vst.msk [vmem:[%s197 + $0x40] sm:$0xff] %vm906, %v887
      %916 = vst.msk [vmem:[%s197 + $0x48] sm:$0xff] %vm906, %v889
      %917 = vst.msk [vmem:[%s197 + $0x50] sm:$0xff] %vm906, %v892
      %918 = vst.msk [vmem:[%s197 + $0x58] sm:$0xff] %vm906, %v894
      %919 = vst.msk [vmem:[%s197 + $0x60] sm:$0xff] %vm906, %v897
      %920 = vst.msk [vmem:[%s197 + $0x68] sm:$0xff] %vm906, %v899
      %921 = vst.msk [vmem:[%s197 + $0x70] sm:$0xff] %vm906, %v902
      %922 = vst.msk [vmem:[%s197 + $0x78] sm:$0xff] %vm906, %v904
      %p923 = scmp.lt.s32.totalorder %s15, 1
      %s924 = scalar_select %p923, %s15, 1
      %s925 = smul.addr %s924, 16
      %s926 = smul.addr %s925, 8
      %s927 = scalar_lea.vmem %s4, %s926
      // Predicated region
      $region37: #{transition_layer_pallas.1} parent=35 // pred_check
        %p928 = pneg %p122
      $region38: #{transition_layer_pallas.1} parent=35 // pred_check_branch
        %930 = sbr.rel (%p928) target = $region40
      $region39: #{transition_layer_pallas.1} parent=35 // pred_region
        _
      $region40: #{transition_layer_pallas.1} parent=35 // pred_fallthru
        _
    $region36: #{transition_layer_pallas.1} parent=5 // pred_fallthru
      _
    %p931 = scmp.le.s32.totalorder 2, %s10
    // Predicated region
    $region41: #{transition_layer_pallas.1} parent=5 // pred_check
      %p932 = pneg %p931
    $region42: #{transition_layer_pallas.1} parent=5 // pred_check_branch
      %934 = sbr.rel (%p932) target = $region44
    $region43: #{transition_layer_pallas.1} parent=5 // pred_region
      %s935 = ssub.s32 %s10, 2
      // Predicated region
      $region45: #{transition_layer_pallas.1} parent=43 // pred_check
        %p936 = pneg %p128
      $region46: #{transition_layer_pallas.1} parent=43 // pred_check_branch
        %938 = sbr.rel (%p936) target = $region48
      $region47: #{transition_layer_pallas.1} parent=43 // pred_region
        %p939 = scmp.lt.s32.totalorder %s16, 1
        %s940 = scalar_select %p939, %s16, 1
        %s941 = smul.addr %s940, 16
        %s942 = smul.addr %s941, 8
        %s943 = scalar_lea.vmem %s4, %s942
      $region48: #{transition_layer_pallas.1} parent=43 // pred_fallthru
        _
    $region44: #{transition_layer_pallas.1} parent=5 // pred_fallthru
      _
  $region6: #{transition_layer_pallas.1} parent=0 // loop_footer
    %s14 = sadd.s32 1, %s10
  $region7: #{transition_layer_pallas.1} parent=0 // loop_footer_branch
    %9 = sbr.rel target = $region3
  $region8: #{transition_layer_pallas.1} parent=0 // loop_exit
    _

</llo_original>
